<compile_context>
chip_gen: v7x
topology: tpu7x:2x2x1
jax: 0.10.0
libtpu: 0.0.40
codegen_flags: <defaults>
</compile_context>

<pallas_src>
import functools

import jax
import jax.numpy as jnp
from jax.experimental import pallas as pl
from jax.experimental.pallas import tpu as pltpu

LANE = 128


def _round_up(x, m):
    return ((x + m - 1) // m) * m


def _pad2d(a, rows, cols):
    return jnp.pad(a, ((0, rows - a.shape[0]), (0, cols - a.shape[1])))


def _pick_row_tile(n_pad):
    # Parallel (row) axis: prefer big tiles for DMA efficiency, but keep at least
    # two row tiles whenever the padded node count allows, so v7x's second
    # TensorCore is not left idle.  (At the toy n_pad=128 only one tile exists.)
    for t in (512, 256):
        if n_pad % t == 0 and n_pad // t >= 2:
            return t
    return 128


def _pick_contraction_tile(n_pad):
    # Contraction axis ("arbitrary"): just a DMA-efficiency knob; bigger is better
    # until the adjacency tile stops fitting comfortably in VMEM.
    for t in (1024, 512, 256):
        if n_pad % t == 0:
            return t
    return 128


def _vmem_limit_bytes(tm, tk, n_pad, c_h, c_out):
    """Explicit scoped-VMEM budget (bf16 streams, f32 accumulator), clamped to 64 MiB."""
    bf16, f32 = 2, 4
    need = (
        2 * tm * tk * bf16          # adjacency tiles, double-buffered
        + 2 * n_pad * c_h * bf16    # resident H (Pallas still allocates 2 buffers)
        + 2 * c_h * c_out * bf16    # resident W2 (fused epilogue)
        + 2 * c_h * f32             # bias row
        + tm * c_h * f32            # f32 accumulator scratch
        + 2 * tm * c_out * f32      # output tile buffers
    )
    return int(min(max(2 * need + (16 << 20), 32 << 20), 64 << 20))


# --------------------------- feature transform ------------------------------ #
def _transform_kernel(x_ref, w_ref, h_ref):
    # One MXU matmul per node-row tile: H_tile = X_tile @ W (f32 accumulation),
    # stored in bf16 so the downstream aggregation streams half the bytes.
    h_ref[...] = jnp.dot(
        x_ref[...], w_ref[...], preferred_element_type=jnp.float32
    ).astype(h_ref.dtype)


def feature_transform(x, w, *, tm, out_dtype=jnp.bfloat16):
    """H = X @ W, tiled over node rows; channel dims kept at full (un-padded) extent."""
    n, c_in = x.shape
    c_out = w.shape[1]
    return pl.pallas_call(
        _transform_kernel,
        out_shape=jax.ShapeDtypeStruct((n, c_out), out_dtype),
        grid_spec=pltpu.PrefetchScalarGridSpec(
            num_scalar_prefetch=0,
            grid=(n // tm,),
            in_specs=[
                # last dim == full array dim (8), legal without 128-padding
                pl.BlockSpec((tm, c_in), lambda i: (i, 0)),
                pl.BlockSpec((c_in, c_out), lambda i: (0, 0)),
            ],
            out_specs=pl.BlockSpec((tm, c_out), lambda i: (i, 0)),
        ),
        compiler_params=pltpu.CompilerParams(dimension_semantics=("parallel",)),
    )(x, w)


# ------------------------ neighborhood aggregation --------------------------- #
def _aggregate_kernel(*refs, tk, apply_relu, fuse_w2):
    if fuse_w2:
        adj_ref, h_ref, b_ref, w2_ref, out_ref, acc_ref = refs
    else:
        adj_ref, h_ref, b_ref, out_ref, acc_ref = refs
        w2_ref = None

    k = pl.program_id(1)

    @pl.when(k == 0)
    def _():
        acc_ref[...] = jnp.zeros_like(acc_ref)

    # H is VMEM-resident (constant block index, fetched once); slice the current
    # contraction chunk out of it.  MXU runs bf16 x bf16 -> f32 accumulate.
    start = pl.multiple_of(k * tk, tk)
    h_k = h_ref[pl.ds(start, tk), :]
    acc_ref[...] += jnp.dot(adj_ref[...], h_k, preferred_element_type=jnp.float32)

    # Epilogue only on the final contraction step: bias, optional ReLU, and the
    # optional fused layer-2 feature transform (h1 @ W2).
    @pl.when(k == pl.num_programs(1) - 1)
    def _():
        res = acc_ref[...] + b_ref[...]
        if apply_relu:
            res = jnp.maximum(res, 0.0)
        if fuse_w2:
            res = jnp.dot(
                res.astype(w2_ref.dtype), w2_ref[...],
                preferred_element_type=jnp.float32,
            )
        out_ref[...] = res.astype(out_ref.dtype)


def aggregate(adj, h, b, w2=None, *, apply_relu, tm, tk, out_dtype):
    """out = (relu?)(A_hat @ H + b) (@ W2 if fused), tiled over (row tiles, contraction)."""
    n = adj.shape[0]
    c_h = h.shape[1]
    fuse_w2 = w2 is not None
    c_out = w2.shape[1] if fuse_w2 else c_h

    in_specs = [
        pl.BlockSpec((tm, tk), lambda i, k: (i, k)),   # adjacency tile (the HBM stream)
        pl.BlockSpec((n, c_h), lambda i, k: (0, 0)),   # full H, VMEM-resident (fetched once)
        pl.BlockSpec((1, c_h), lambda i, k: (0, 0)),   # bias row, resident
    ]
    operands = [adj, h, b]
    if fuse_w2:
        in_specs.append(pl.BlockSpec((c_h, c_out), lambda i, k: (0, 0)))  # W2 resident
        operands.append(w2)

    return pl.pallas_call(
        functools.partial(
            _aggregate_kernel, tk=tk, apply_relu=apply_relu, fuse_w2=fuse_w2
        ),
        out_shape=jax.ShapeDtypeStruct((n, c_out), out_dtype),
        grid_spec=pltpu.PrefetchScalarGridSpec(
            num_scalar_prefetch=0,
            grid=(n // tm, n // tk),
            in_specs=in_specs,
            out_specs=pl.BlockSpec((tm, c_out), lambda i, k: (i, 0)),
            scratch_shapes=[pltpu.VMEM((tm, c_h), jnp.float32)],
        ),
        compiler_params=pltpu.CompilerParams(
            dimension_semantics=("parallel", "arbitrary"),
            vmem_limit_bytes=_vmem_limit_bytes(tm, tk, n, c_h, c_out),
        ),
    )(*operands)


# ------------------------------ JAX glue ----------------------------------- #
def gcn_normalized_adjacency(edge_index, edge_weight, num_nodes):
    """Dense D^{-1/2}(A+I)D^{-1/2}, matching PyG gcn_norm(add_self_loops=True)."""
    if edge_weight is None:
        edge_weight = jnp.ones((edge_index.shape[1],), dtype=jnp.float32)
    loop_idx = jnp.arange(num_nodes, dtype=edge_index.dtype)
    row = jnp.concatenate([edge_index[0], loop_idx])
    col = jnp.concatenate([edge_index[1], loop_idx])
    w = jnp.concatenate([edge_weight, jnp.ones((num_nodes,), jnp.float32)])
    # deg at target (col) nodes, as in PyG flow="source_to_target"
    deg = jnp.zeros((num_nodes,), jnp.float32).at[col].add(w)
    deg_inv_sqrt = jnp.where(deg > 0, 1.0 / jnp.sqrt(deg), 0.0)
    norm = deg_inv_sqrt[row] * w * deg_inv_sqrt[col]
    # out[col] += norm * x[row]  <=>  out = A_hat @ x with A_hat[col, row] = norm
    # (duplicate edges are summed — same as PyG's scatter-add message passing)
    adj = jnp.zeros((num_nodes, num_nodes), jnp.float32).at[col, row].add(norm)
    return adj
    # TODO(synk): for real (sparse, large-N) graphs, replace the dense A_hat with a
    # block-sparse layout (per row-tile nonzero-block lists in SMEM via
    # PrefetchScalarGridSpec + data-dependent index_map) instead of O(N^2) traffic.


def glorot(key, shape):
    fan_in, fan_out = shape
    limit = jnp.sqrt(6.0 / (fan_in + fan_out))
    return jax.random.uniform(key, shape, jnp.float32, -limit, limit)


def gcn_forward(params, x, edge_index, edge_weight=None):
    n, c_in = x.shape
    c_hid = params["w1"].shape[1]
    c_out = params["w2"].shape[1]

    # Pad node dim and the weight/bias lane dims to 128 multiples (lane-dense
    # blocks and unmasked stores).  X's channel dim is deliberately NOT padded.
    n_pad = _round_up(n, LANE)
    chid_p = _round_up(c_hid, LANE)
    cout_p = _round_up(c_out, LANE)
    tm = _pick_row_tile(n_pad)
    tk = _pick_contraction_tile(n_pad)

    adj = gcn_normalized_adjacency(edge_index, edge_weight, n)
    # bf16 adjacency: halves the dominant O(N^2) HBM stream; f32 accumulate in-kernel.
    adj_p = _pad2d(adj, n_pad, n_pad).astype(jnp.bfloat16)

    x_p = jnp.pad(x, ((0, n_pad - n), (0, 0)))                       # (n_pad, c_in) f32
    w1_p = jnp.pad(params["w1"], ((0, 0), (0, chid_p - c_hid)))       # (c_in, chid_p) f32
    b1_p = _pad2d(params["b1"], 1, chid_p)                            # (1, chid_p) f32
    w2_p = _pad2d(params["w2"], chid_p, cout_p).astype(jnp.bfloat16)  # (chid_p, cout_p) bf16
    b2_p = _pad2d(params["b2"], 1, cout_p)                            # (1, cout_p) f32

    # layer 1 (+ fused layer-2 feature transform):
    #   H = X @ W1                       (bf16 out)
    #   G = relu(A_hat @ H + b1) @ W2    (bf16 out; no h1 HBM round-trip)
    h = feature_transform(x_p, w1_p, tm=tm, out_dtype=jnp.bfloat16)
    g = aggregate(adj_p, h, b1_p, w2_p, apply_relu=True, tm=tm, tk=tk,
                  out_dtype=jnp.bfloat16)
    # TODO(synk): F.dropout(training=self.training) — identity in eval mode, omitted.
    # layer 2 aggregation: out = A_hat @ G + b2
    out_p = aggregate(adj_p, g, b2_p, None, apply_relu=False, tm=tm, tk=tk,
                      out_dtype=jnp.float32)
    return out_p[:n, :c_out]


# -------------------------------- main -------------------------------------- #
if __name__ == "__main__":
    key = jax.random.PRNGKey(0)
    k_x, k_e, k_w1, k_w2 = jax.random.split(key, 4)

    num_nodes = 16
    in_channels = 8
    hidden_channels = 32
    out_channels = 4
    num_edges = 40

    x = jax.random.normal(k_x, (num_nodes, in_channels), jnp.float32)
    edge_index = jax.random.randint(k_e, (2, num_edges), 0, num_nodes, jnp.int32)
    edge_weight = None  # defaults to ones (unweighted graph)

    params = {
        "w1": glorot(k_w1, (in_channels, hidden_channels)),
        "b1": jnp.zeros((1, hidden_channels), jnp.float32),
        "w2": glorot(k_w2, (hidden_channels, out_channels)),
        "b2": jnp.zeros((1, out_channels), jnp.float32),
    }

    out = gcn_forward(params, x, edge_index, edge_weight)
    jax.block_until_ready(out)
    assert out.shape == (num_nodes, out_channels)

    # pure-JAX f32 reference; tolerance loosened to cover the bf16 adjacency / H cast.
    adj_ref = gcn_normalized_adjacency(edge_index, edge_weight, num_nodes)
    h1_ref = jnp.maximum(adj_ref @ (x @ params["w1"]) + params["b1"], 0.0)
    out_ref = adj_ref @ (h1_ref @ params["w2"]) + params["b2"]
    assert jnp.allclose(out, out_ref, atol=5e-2, rtol=5e-2), float(
        jnp.max(jnp.abs(out - out_ref))
    )

    print("KERNEL_OK")
</pallas_src>

<mosaic_0001>
module attributes {stable_mosaic.version = 11 : i64} {
  func.func @_transform_kernel(%arg0: i32, %arg1: memref<128x8xf32, #tpu.memory_space<vmem>>, %arg2: memref<8x128xf32, #tpu.memory_space<vmem>>, %arg3: memref<128x128xbf16, #tpu.memory_space<vmem>>) attributes {dimension_semantics = [#tpu.dimension_semantics<parallel>], iteration_bounds = array<i64: 1>, scalar_prefetch = 0 : i64, scratch_operands = 0 : i64, tpu.core_type = #tpu.core_type<tc>, window_params = [{transform_indices = @transform_0, window_bounds = array<i64: 128, 8>}, {pipeline_mode = #tpu.pipeline_mode<synchronous>, transform_indices = @transform_1, window_bounds = array<i64: 8, 128>}, {transform_indices = @transform_2, window_bounds = array<i64: 128, 128>}]} {
    %c0 = arith.constant 0 : index
    %c0_0 = arith.constant 0 : index
    %0 = vector.load %arg1[%c0, %c0_0] : memref<128x8xf32, #tpu.memory_space<vmem>>, vector<128x8xf32>
    %c0_1 = arith.constant 0 : index
    %c0_2 = arith.constant 0 : index
    %1 = vector.load %arg2[%c0_1, %c0_2] : memref<8x128xf32, #tpu.memory_space<vmem>>, vector<8x128xf32>
    %cst = arith.constant dense<0.000000e+00> : vector<128x128xf32>
    %2 = tpu.matmul %0, %1, %cst {dimension_numbers = #tpu.dot_dimension_numbers<[1], [0], [0], [1], [0, 0, 1, 1], [], []>} : vector<128x8xf32>, vector<8x128xf32>, vector<128x128xf32> -> vector<128x128xf32>
    %3 = arith.truncf %2 : vector<128x128xf32> to vector<128x128xbf16>
    %c0_3 = arith.constant 0 : index
    %c0_4 = arith.constant 0 : index
    %4 = vector.load %arg3[%c0_3, %c0_4] : memref<128x128xbf16, #tpu.memory_space<vmem>>, vector<128x128xbf16>
    tpu.vector_store %arg3[%c0_3, %c0_4], %3 {strides = array<i32>} : memref<128x128xbf16, #tpu.memory_space<vmem>>, vector<128x128xbf16>,
    return
  }
  func.func @transform_0(%arg0: i32) -> (i32, i32) {
    %c0_i32 = arith.constant 0 : i32
    %c0_i32_0 = arith.constant 0 : i32
    return %arg0, %c0_i32 : i32, i32
  }
  func.func @transform_1(%arg0: i32) -> (i32, i32) {
    %c0_i32 = arith.constant 0 : i32
    %c0_i32_0 = arith.constant 0 : i32
    %c0_i32_1 = arith.constant 0 : i32
    return %c0_i32, %c0_i32_0 : i32, i32
  }
  func.func @transform_2(%arg0: i32) -> (i32, i32) {
    %c0_i32 = arith.constant 0 : i32
    %c0_i32_0 = arith.constant 0 : i32
    return %arg0, %c0_i32 : i32, i32
  }
}

</mosaic_0001>

<llo_original>
// kernel: tpu_custom_call.1
$region0: #{tpu_custom_call.1}
  #allocation0 [shape = 'u32[]', space=smem, size = 0x4, offset = 0x4, fixed_abs, tag = 'smem constant byte address 0x4 - core index']
  #allocation1 [shape = 'u32[144,128]{1,0:T(1,128)}', space=vmem, size = 0x12000, scoped, tag = 'internal scratch']
  %s0 = inlined_call_operand.vmem [shape: f32[128,8], index: 0, kind: input, shape index: {}]
  %s1 = inlined_call_operand.vmem [shape: f32[8,128], index: 1, kind: input, shape index: {}]
  %s2 = inlined_call_operand.hbm [shape: bf16[128,128], index: 2, kind: output, shape index: {}]
  %s3 = sld [smem:[#allocation0]]
  $region18: #{tpu_custom_call.1} parent=0
    _
  %s5 = ssub.s32 1, %s3
  %s6 = scalar_select 0, %s5, %s3
  $region1: #{tpu_custom_call.1} parent=0
    #allocation2 [shape = 'u8[32768]{0}', space=vmem, size = 0x8000, scoped, tag = 'output window, operand 0, single buffered']
    #allocation3 [shape = 's32[1]{0}', space=sflag, size = 0x4, scoped, tag = 'scoped memory for tpu_custom_call.1']
    %7 = vsyncpa [#allocation3], 0
    // Predicated region
    $region2: #{tpu_custom_call.1} parent=1 // pred_check
      _
    $region3: #{tpu_custom_call.1} parent=1 // pred_check_branch
      %9 = sbr.rel (0) target = $region5
    $region4: #{tpu_custom_call.1} parent=1 // pred_region
      _
    $region5: #{tpu_custom_call.1} parent=1 // pred_fallthru
      _
    // Predicated region
    $region6: #{tpu_custom_call.1} parent=1 // pred_check
      _
    $region7: #{tpu_custom_call.1} parent=1 // pred_check_branch
      %11 = sbr.rel (0) target = $region9
    $region8: #{tpu_custom_call.1} parent=1 // pred_region
      _
    $region9: #{tpu_custom_call.1} parent=1 // pred_fallthru
      _
    %v12 = vld [vmem:[%s0] sm:$0xff]
    %v13 = vld [vmem:[%s0 + $0x8] sm:$0xff]
    %v14 = vld [vmem:[%s0 + $0x10] sm:$0xff]
    %v15 = vld [vmem:[%s0 + $0x18] sm:$0xff]
    %v16 = vld [vmem:[%s0 + $0x20] sm:$0xff]
    %v17 = vld [vmem:[%s0 + $0x28] sm:$0xff]
    %v18 = vld [vmem:[%s0 + $0x30] sm:$0xff]
    %v19 = vld [vmem:[%s0 + $0x38] sm:$0xff]
    %v20 = vld [vmem:[%s0 + $0x40] sm:$0xff]
    %v21 = vld [vmem:[%s0 + $0x48] sm:$0xff]
    %v22 = vld [vmem:[%s0 + $0x50] sm:$0xff]
    %v23 = vld [vmem:[%s0 + $0x58] sm:$0xff]
    %v24 = vld [vmem:[%s0 + $0x60] sm:$0xff]
    %v25 = vld [vmem:[%s0 + $0x68] sm:$0xff]
    %v26 = vld [vmem:[%s0 + $0x70] sm:$0xff]
    %v27 = vld [vmem:[%s0 + $0x78] sm:$0xff]
    %v28 = vld [vmem:[%s1] sm:$0xff]
    %vm29 = vcmask 64512
    %v31 = vsel %vm29, %v12, 0
    %v34 = vsel %vm29, %v13, 0
    %v37 = vsel %vm29, %v14, 0
    %v40 = vsel %vm29, %v15, 0
    %v43 = vsel %vm29, %v16, 0
    %v46 = vsel %vm29, %v17, 0
    %v49 = vsel %vm29, %v18, 0
    %v52 = vsel %vm29, %v19, 0
    %v55 = vsel %vm29, %v20, 0
    %v58 = vsel %vm29, %v21, 0
    %v61 = vsel %vm29, %v22, 0
    %v64 = vsel %vm29, %v23, 0
    %v67 = vsel %vm29, %v24, 0
    %v70 = vsel %vm29, %v25, 0
    %v73 = vsel %vm29, %v26, 0
    %v76 = vsel %vm29, %v27, 0
    %78 = vmatprep.subr.mxu0 0.0
    %79 = vmatpush1.msra.mxu0 %v28
    %80 = vmatprep.subr.mxu0 0.0
    %81 = vmatpush1.msra.mxu0 0.0
    %82 = vmatprep.subr.mxu0 0.0
    %83 = vmatpush1.msra.mxu0 0.0
    %84 = vmatprep.subr.mxu0 0.0
    %85 = vmatpush1.msra.mxu0 0.0
    %86 = vmatprep.subr.mxu0 0.0
    %87 = vmatpush1.msra.mxu0 0.0
    %88 = vmatprep.subr.mxu0 0.0
    %89 = vmatpush1.msra.mxu0 0.0
    %90 = vmatprep.subr.mxu0 0.0
    %91 = vmatpush1.msra.mxu0 0.0
    %92 = vmatprep.subr.mxu0 0.0
    %93 = vmatpush1.msra.mxu0 0.0
    %94 = vmatprep.subr.mxu0 0.0
    %95 = vmatpush1.msra.mxu0 0.0
    %96 = vmatprep.subr.mxu0 0.0
    %97 = vmatpush1.msra.mxu0 0.0
    %98 = vmatprep.subr.mxu0 0.0
    %99 = vmatpush1.msra.mxu0 0.0
    %100 = vmatprep.subr.mxu0 0.0
    %101 = vmatpush1.msra.mxu0 0.0
    %102 = vmatprep.subr.mxu0 0.0
    %103 = vmatpush1.msra.mxu0 0.0
    %104 = vmatprep.subr.mxu0 0.0
    %105 = vmatpush1.msra.mxu0 0.0
    %106 = vmatprep.subr.mxu0 0.0
    %107 = vmatpush1.msra.mxu0 0.0
    %108 = vmatprep.subr.mxu0 0.0
    %109 = vmatpush1.msra.mxu0 0.0
    %110 = vmatprep.subr.mxu0 0.0
    %111 = vmatpush1.msra.mxu0 0.0
    %112 = vmatprep.subr.mxu0 0.0
    %113 = vmatpush1.msra.mxu0 0.0
    %114 = vmatprep.subr.mxu0 0.0
    %115 = vmatpush1.msra.mxu0 0.0
    %116 = vmatprep.subr.mxu0 0.0
    %117 = vmatpush1.msra.mxu0 0.0
    %118 = vmatprep.subr.mxu0 0.0
    %119 = vmatpush1.msra.mxu0 0.0
    %120 = vmatprep.subr.mxu0 0.0
    %121 = vmatpush1.msra.mxu0 0.0
    %122 = vmatprep.subr.mxu0 0.0
    %123 = vmatpush1.msra.mxu0 0.0
    %124 = vmatprep.subr.mxu0 0.0
    %125 = vmatpush1.msra.mxu0 0.0
    %126 = vmatprep.subr.mxu0 0.0
    %127 = vmatpush1.msra.mxu0 0.0
    %128 = vmatprep.subr.mxu0 0.0
    %129 = vmatpush1.msra.mxu0 0.0
    %130 = vmatprep.subr.mxu0 0.0
    %131 = vmatpush1.msra.mxu0 0.0
    %132 = vmatprep.subr.mxu0 0.0
    %133 = vmatpush1.msra.mxu0 0.0
    %134 = vmatprep.subr.mxu0 0.0
    %135 = vmatpush1.msra.mxu0 0.0
    %136 = vmatprep.subr.mxu0 0.0
    %137 = vmatpush1.msra.mxu0 0.0
    %138 = vmatprep.subr.mxu0 0.0
    %139 = vmatpush1.msra.mxu0 0.0
    %140 = vmatprep.subr.mxu0 0.0
    %141 = vmatpush1.msra.mxu0 0.0
    %142 = vmatprep.mubr.f32.mxu0 0.0
    %143 = vmatmul.mubr.f32.gmra.mrb[0].mxu0 %v31
    %v144 = vpop.f32.mrb[0].mxu0
    %v145 = vadd.f32 0.0, %v144
    %v146 = vpop.f32.mrb[0].mxu0
    %147 = vmatprep.mubr.f32.mxu0 0.0
    %148 = vmatmul.mubr.f32.gmra.mrb[0].mxu0 %v34
    %v149 = vpop.f32.mrb[0].mxu0
    %v150 = vadd.f32 0.0, %v149
    %v151 = vpop.f32.mrb[0].mxu0
    %152 = vmatprep.mubr.f32.mxu0 0.0
    %153 = vmatmul.mubr.f32.gmra.mrb[0].mxu0 %v37
    %v154 = vpop.f32.mrb[0].mxu0
    %v155 = vadd.f32 0.0, %v154
    %v156 = vpop.f32.mrb[0].mxu0
    %157 = vmatprep.mubr.f32.mxu0 0.0
    %158 = vmatmul.mubr.f32.gmra.mrb[0].mxu0 %v40
    %v159 = vpop.f32.mrb[0].mxu0
    %v160 = vadd.f32 0.0, %v159
    %v161 = vpop.f32.mrb[0].mxu0
    %162 = vmatprep.mubr.f32.mxu0 0.0
    %163 = vmatmul.mubr.f32.gmra.mrb[0].mxu0 %v43
    %v164 = vpop.f32.mrb[0].mxu0
    %v165 = vadd.f32 0.0, %v164
    %v166 = vpop.f32.mrb[0].mxu0
    %167 = vmatprep.mubr.f32.mxu0 0.0
    %168 = vmatmul.mubr.f32.gmra.mrb[0].mxu0 %v46
    %v169 = vpop.f32.mrb[0].mxu0
    %v170 = vadd.f32 0.0, %v169
    %v171 = vpop.f32.mrb[0].mxu0
    %172 = vmatprep.mubr.f32.mxu0 0.0
    %173 = vmatmul.mubr.f32.gmra.mrb[0].mxu0 %v49
    %v174 = vpop.f32.mrb[0].mxu0
    %v175 = vadd.f32 0.0, %v174
    %v176 = vpop.f32.mrb[0].mxu0
    %177 = vmatprep.mubr.f32.mxu0 0.0
    %178 = vmatmul.mubr.f32.gmra.mrb[0].mxu0 %v52
    %v179 = vpop.f32.mrb[0].mxu0
    %v180 = vadd.f32 0.0, %v179
    %v181 = vpop.f32.mrb[0].mxu0
    %182 = vmatprep.mubr.f32.mxu0 0.0
    %183 = vmatmul.mubr.f32.gmra.mrb[0].mxu0 %v55
    %v184 = vpop.f32.mrb[0].mxu0
    %v185 = vadd.f32 0.0, %v184
    %v186 = vpop.f32.mrb[0].mxu0
    %187 = vmatprep.mubr.f32.mxu0 0.0
    %188 = vmatmul.mubr.f32.gmra.mrb[0].mxu0 %v58
    %v189 = vpop.f32.mrb[0].mxu0
    %v190 = vadd.f32 0.0, %v189
    %v191 = vpop.f32.mrb[0].mxu0
    %192 = vmatprep.mubr.f32.mxu0 0.0
    %193 = vmatmul.mubr.f32.gmra.mrb[0].mxu0 %v61
    %v194 = vpop.f32.mrb[0].mxu0
    %v195 = vadd.f32 0.0, %v194
    %v196 = vpop.f32.mrb[0].mxu0
    %197 = vmatprep.mubr.f32.mxu0 0.0
    %198 = vmatmul.mubr.f32.gmra.mrb[0].mxu0 %v64
    %v199 = vpop.f32.mrb[0].mxu0
    %v200 = vadd.f32 0.0, %v199
    %v201 = vpop.f32.mrb[0].mxu0
    %202 = vmatprep.mubr.f32.mxu0 0.0
    %203 = vmatmul.mubr.f32.gmra.mrb[0].mxu0 %v67
    %v204 = vpop.f32.mrb[0].mxu0
    %v205 = vadd.f32 0.0, %v204
    %v206 = vpop.f32.mrb[0].mxu0
    %207 = vmatprep.mubr.f32.mxu0 0.0
    %208 = vmatmul.mubr.f32.gmra.mrb[0].mxu0 %v70
    %v209 = vpop.f32.mrb[0].mxu0
    %v210 = vadd.f32 0.0, %v209
    %v211 = vpop.f32.mrb[0].mxu0
    %212 = vmatprep.mubr.f32.mxu0 0.0
    %213 = vmatmul.mubr.f32.gmra.mrb[0].mxu0 %v73
    %v214 = vpop.f32.mrb[0].mxu0
    %v215 = vadd.f32 0.0, %v214
    %v216 = vpop.f32.mrb[0].mxu0
    %217 = vmatprep.mubr.f32.mxu0 0.0
    %218 = vmatmul.mubr.f32.gmra.mrb[0].mxu0 %v76
    %v219 = vpop.f32.mrb[0].mxu0
    %v220 = vadd.f32 0.0, %v219
    %v221 = vpop.f32.mrb[0].mxu0
    %222 = vdwg.mxu0
    %v223 = vpack.c.bf16 %v150, %v145
    %v224 = vpack.c.bf16 %v160, %v155
    %v225 = vpack.c.bf16 %v170, %v165
    %v226 = vpack.c.bf16 %v180, %v175
    %v227 = vpack.c.bf16 %v190, %v185
    %v228 = vpack.c.bf16 %v200, %v195
    %v229 = vpack.c.bf16 %v210, %v205
    %v230 = vpack.c.bf16 %v220, %v215
    %v239 = vunpack.c.l.b16 %v223
    %v240 = vunpack.c.h.b16 %v223
    %v241 = vunpack.c.l.b16 %v224
    %v242 = vunpack.c.h.b16 %v224
    %v243 = vunpack.c.l.b16 %v225
    %v244 = vunpack.c.h.b16 %v225
    %v245 = vunpack.c.l.b16 %v226
    %v246 = vunpack.c.h.b16 %v226
    %v247 = vunpack.c.l.b16 %v227
    %v248 = vunpack.c.h.b16 %v227
    %v249 = vunpack.c.l.b16 %v228
    %v250 = vunpack.c.h.b16 %v228
    %v251 = vunpack.c.l.b16 %v229
    %v252 = vunpack.c.h.b16 %v229
    %v253 = vunpack.c.l.b16 %v230
    %v254 = vunpack.c.h.b16 %v230
    %v255 = vpack.c.b16 %v239, %v239
    %v256 = vpack.c.b16 %v240, %v240
    %v257 = vpack.c.b16 %v241, %v241
    %v258 = vpack.c.b16 %v242, %v242
    %v259 = vpack.c.b16 %v243, %v243
    %v260 = vpack.c.b16 %v244, %v244
    %v261 = vpack.c.b16 %v245, %v245
    %v262 = vpack.c.b16 %v246, %v246
    %v263 = vpack.c.b16 %v247, %v247
    %v264 = vpack.c.b16 %v248, %v248
    %v265 = vpack.c.b16 %v249, %v249
    %v266 = vpack.c.b16 %v250, %v250
    %v267 = vpack.c.b16 %v251, %v251
    %v268 = vpack.c.b16 %v252, %v252
    %v269 = vpack.c.b16 %v253, %v253
    %v270 = vpack.c.b16 %v254, %v254
    %287 = vst [vmem:[#allocation2] sm:$0xf] %v255
    %288 = vst [vmem:[#allocation2 + $0x4] sm:$0xf] %v256
    %289 = vst [vmem:[#allocation2 + $0x8] sm:$0xf] %v257
    %290 = vst [vmem:[#allocation2 + $0xc] sm:$0xf] %v258
    %291 = vst [vmem:[#allocation2 + $0x10] sm:$0xf] %v259
    %292 = vst [vmem:[#allocation2 + $0x14] sm:$0xf] %v260
    %293 = vst [vmem:[#allocation2 + $0x18] sm:$0xf] %v261
    %294 = vst [vmem:[#allocation2 + $0x1c] sm:$0xf] %v262
    %295 = vst [vmem:[#allocation2 + $0x20] sm:$0xf] %v263
    %296 = vst [vmem:[#allocation2 + $0x24] sm:$0xf] %v264
    %297 = vst [vmem:[#allocation2 + $0x28] sm:$0xf] %v265
    %298 = vst [vmem:[#allocation2 + $0x2c] sm:$0xf] %v266
    %299 = vst [vmem:[#allocation2 + $0x30] sm:$0xf] %v267
    %300 = vst [vmem:[#allocation2 + $0x34] sm:$0xf] %v268
    %301 = vst [vmem:[#allocation2 + $0x38] sm:$0xf] %v269
    %302 = vst [vmem:[#allocation2 + $0x3c] sm:$0xf] %v270
    // Predicated region
    $region10: #{tpu_custom_call.1} parent=1 // pred_check
      _
    $region11: #{tpu_custom_call.1} parent=1 // pred_check_branch
      %304 = sbr.rel (0) target = $region13
    $region12: #{tpu_custom_call.1} parent=1 // pred_region
      %s306 = ssub.s32 1024, 1024
      %307 = vsyncadd [#allocation3], %s306
      %s308 = sshll.u32 [#allocation2], 4
      %s309 = int_to_ptr.vmem [resolvable:$true] %s308
      %314 = dma.vmem_to_hbm [thread:$0]  %s309, 1024, %s2, [#allocation3], 64, 64, 4
    $region13: #{tpu_custom_call.1} parent=1 // pred_fallthru
      _
    // Predicated region
    $region14: #{tpu_custom_call.1} parent=1 // pred_check
      _
    $region15: #{tpu_custom_call.1} parent=1 // pred_check_branch
      %316 = sbr.rel (0) target = $region17
    $region16: #{tpu_custom_call.1} parent=1 // pred_region
      %317 = dma.done [#allocation3], 1024
    $region17: #{tpu_custom_call.1} parent=1 // pred_fallthru
      _
    %318 = vsyncpa [#allocation3], 1

</llo_original>
